<compile_context>
chip_gen: v7x
topology: tpu7x:2x2x1
jax: 0.10.0
libtpu: 0.0.40
codegen_flags: <defaults>
</compile_context>

<pallas_src>
import functools

import jax
import jax.numpy as jnp
from jax.experimental import pallas as pl
from jax.experimental.pallas import tpu as pltpu


def _round_up(x, m):
    return ((x + m - 1) // m) * m


def _critic_kernel(state_ref, action_ref,
                   w1_ref, b1_ref,
                   w2h_ref, w2a_ref, b2_ref,
                   w22_ref, b22_ref,
                   w3_ref, b3_ref,
                   out_ref):
    # fc1 + relu   (bf16 MXU inputs, f32 accumulation, bf16 intermediate)
    h1 = jnp.maximum(
        jnp.dot(state_ref[...], w1_ref[...],
                preferred_element_type=jnp.float32) + b1_ref[...],
        0.0).astype(jnp.bfloat16)

    # fc2 on concat([h1, action], 1) + relu.
    # Action part is a small K=8 (zero-padded) f32 matmul -> stays precise and
    # off the VALU; h1 part is the usual bf16 MXU matmul.
    a_term = jnp.dot(action_ref[...], w2a_ref[...],
                     preferred_element_type=jnp.float32)
    h2 = jnp.maximum(
        jnp.dot(h1, w2h_ref[...],
                preferred_element_type=jnp.float32) + a_term + b2_ref[...],
        0.0).astype(jnp.bfloat16)

    # fc2_2 + relu
    h3 = jnp.maximum(
        jnp.dot(h2, w22_ref[...],
                preferred_element_type=jnp.float32) + b22_ref[...],
        0.0).astype(jnp.bfloat16)

    # fc3 (lane-padded atoms) + softmax over atoms.
    # Pad columns carry bias -1e30 (f32) -> exp underflows to 0 -> they do not
    # perturb the max or the normalization of the real atoms.
    logits = jnp.dot(h3, w3_ref[...],
                     preferred_element_type=jnp.float32) + b3_ref[...]
    m = jnp.max(logits, axis=-1, keepdims=True)
    e = jnp.exp(logits - m)
    denom = jnp.sum(e, axis=-1, keepdims=True)
    out_ref[...] = (e / denom).astype(out_ref.dtype)   # exact divide


def prepare_params(params):
    """One-time weight prep (casts + padding). Call ONCE, outside the hot path."""
    H = params["w2h"].shape[0]               # 256
    S = params["w1"].shape[0]
    A = params["w2a"].shape[0]
    n_atoms = params["w3"].shape[1]
    atoms_pad = _round_up(n_atoms, 128)       # lane-dense output width
    a_pad = _round_up(max(A, 8), 8)           # pad tiny K so the action matmul is aligned

    w2a_p = jnp.zeros((a_pad, H), jnp.float32)
    w2a_p = w2a_p.at[:A, :].set(params["w2a"].astype(jnp.float32))

    w3p = jnp.zeros((H, atoms_pad), jnp.bfloat16)
    w3p = w3p.at[:, :n_atoms].set(params["w3"].astype(jnp.bfloat16))
    # keep the pad-masking bias in f32 (-1e30 would become -inf in bf16)
    b3p = jnp.full((1, atoms_pad), -1e30, jnp.float32)
    b3p = b3p.at[:, :n_atoms].set(params["b3"].astype(jnp.float32).reshape(1, -1))

    return {
        "w1": params["w1"].astype(jnp.bfloat16),
        "b1": params["b1"].astype(jnp.float32).reshape(1, -1),
        "w2h": params["w2h"].astype(jnp.bfloat16),
        "w2a": w2a_p,
        "b2": params["b2"].astype(jnp.float32).reshape(1, -1),
        "w22": params["w22"].astype(jnp.bfloat16),
        "b22": params["b22"].astype(jnp.float32).reshape(1, -1),
        "w3": w3p,
        "b3": b3p,
    }


@functools.partial(jax.jit, static_argnames=("n_atoms", "block_b"))
def critic_forward(state, action, prepped, *, n_atoms, block_b=512):
    # block_b: 512 is a good default for v6e/v7x; prefer 128-256 on v5e.
    B, S = state.shape
    A = action.shape[1]
    H = prepped["w2h"].shape[1]               # 256
    a_pad = prepped["w2a"].shape[0]
    atoms_pad = prepped["w3"].shape[1]

    # --- batch tiling: multiples of 16; ensure >=2 grid steps when possible so
    # the "parallel" axis splits across both TensorCores on v7x. --------------
    GRAN = 16
    b_ceil = _round_up(B, GRAN)
    tb = min(block_b, b_ceil)
    if b_ceil // tb < 2 and b_ceil > GRAN:
        tb = _round_up((b_ceil + 1) // 2, GRAN)
    b_pad = _round_up(b_ceil, tb)
    grid = (b_pad // tb,)

    state_bf = jnp.pad(state, ((0, b_pad - B), (0, 0))).astype(jnp.bfloat16)
    action_f = jnp.pad(action.astype(jnp.float32),
                       ((0, b_pad - B), (0, a_pad - A)))

    def batch_spec(feat):
        return pl.BlockSpec((tb, feat), lambda i: (i, 0))

    def resident_spec(shape):
        # full-array block, constant block index -> loaded once, stays in VMEM
        return pl.BlockSpec(shape, lambda i: (0, 0))

    # Advisory cost estimate so XLA overlaps the surrounding pad/cast/slice ops.
    flops = 2 * b_pad * H * (S + a_pad + H + H + atoms_pad)
    transcendentals = b_pad * atoms_pad
    bytes_accessed = (
        b_pad * S * 2 + b_pad * a_pad * 4                 # activations in
        + (S * H + 2 * H * H + H * atoms_pad) * 2          # bf16 weights
        + a_pad * H * 4 + 3 * H * 4 + atoms_pad * 4        # f32 weights/biases
        + b_pad * atoms_pad * 2)                           # bf16 output

    out_pad = pl.pallas_call(
        _critic_kernel,
        out_shape=jax.ShapeDtypeStruct((b_pad, atoms_pad), jnp.bfloat16),
        grid=grid,
        in_specs=[
            batch_spec(S),                      # state
            batch_spec(a_pad),                  # action (K-padded)
            resident_spec((S, H)),              # w1
            resident_spec((1, H)),              # b1
            resident_spec((H, H)),              # w2h
            resident_spec((a_pad, H)),          # w2a (K-padded, f32)
            resident_spec((1, H)),              # b2
            resident_spec((H, H)),              # w22
            resident_spec((1, H)),              # b22
            resident_spec((H, atoms_pad)),      # w3 (lane-padded)
            resident_spec((1, atoms_pad)),      # b3 (lane-padded, f32)
        ],
        out_specs=batch_spec(atoms_pad),
        compiler_params=pltpu.CompilerParams(
            dimension_semantics=("parallel",)),
        cost_estimate=pl.CostEstimate(
            flops=flops, transcendentals=transcendentals,
            bytes_accessed=bytes_accessed),
    )(state_bf, action_f,
      prepped["w1"], prepped["b1"], prepped["w2h"], prepped["w2a"],
      prepped["b2"], prepped["w22"], prepped["b22"],
      prepped["w3"], prepped["b3"])

    # single fused slice + upcast back to f32 probabilities
    return out_pad[:B, :n_atoms].astype(jnp.float32)


def init_params(key, state_size, action_size, n_atoms):
    """Deterministic synthetic init mirroring the PyTorch module's init_weights.

    fanin_init draws normal(0, 1/sqrt(out_features)) for fc1/fc2/fc2_2 weights;
    fc3 weight ~ normal(0, 0.0003); biases use PyTorch's default Linear bias
    init, uniform(-1/sqrt(in_features), 1/sqrt(in_features)).
    Master weights are kept in f32; prepare_params() does the bf16/pad prep once.
    """
    ks = jax.random.split(key, 8)

    def lin_w(k, in_f, out_f, std):
        # stored as (in, out) == W.T of the PyTorch (out, in) weight
        return jax.random.normal(k, (in_f, out_f), jnp.float32) * std

    def lin_b(k, in_f, out_f):
        bound = 1.0 / jnp.sqrt(jnp.float32(in_f))
        return jax.random.uniform(k, (1, out_f), jnp.float32, -bound, bound)

    hidden = 256
    std_fanin = 1.0 / jnp.sqrt(jnp.float32(hidden))  # fanin = out_features = 256

    w2_full = lin_w(ks[2], hidden + action_size, hidden, std_fanin)
    params = {
        "w1": lin_w(ks[0], state_size, hidden, std_fanin),
        "b1": lin_b(ks[1], state_size, hidden),
        "w2h": w2_full[:hidden, :],
        "w2a": w2_full[hidden:, :],
        "b2": lin_b(ks[3], hidden + action_size, hidden),
        "w22": lin_w(ks[4], hidden, hidden, std_fanin),
        "b22": lin_b(ks[5], hidden, hidden),
        "w3": lin_w(ks[6], hidden, n_atoms, 0.0003),
        "b3": lin_b(ks[7], hidden, n_atoms),
    }
    return params


if __name__ == "__main__":
    key = jax.random.PRNGKey(0)
    k_state, k_action, k_params = jax.random.split(key, 3)

    batch = 8
    state_size = 16
    action_size = 4
    n_atoms = 51  # dist_info = {'type': 'categorical', 'n_atoms': 51}

    state = jax.random.normal(k_state, (batch, state_size), jnp.float32)
    action = jax.random.normal(k_action, (batch, action_size), jnp.float32)
    params = init_params(k_params, state_size, action_size, n_atoms)
    prepped = prepare_params(params)   # one-time weight prep (hoisted out of forward)

    out = critic_forward(state, action, prepped, n_atoms=n_atoms)
    out = jax.block_until_ready(out)

    # sanity: shape and softmax rows sum to 1 (bf16 writeback -> ~1e-3 rounding)
    assert out.shape == (batch, n_atoms)
    assert jnp.allclose(jnp.sum(out, axis=1), 1.0, atol=1e-2)

    # cross-check against a pure-JAX reference using the same bf16/f32 mix
    def ref(state, action, p):
        bf = jnp.bfloat16
        h1 = jax.nn.relu(
            jnp.dot(state.astype(bf), p["w1"].astype(bf),
                    preferred_element_type=jnp.float32) + p["b1"])
        h2 = jax.nn.relu(
            jnp.dot(h1.astype(bf), p["w2h"].astype(bf),
                    preferred_element_type=jnp.float32)
            + action @ p["w2a"] + p["b2"])
        h3 = jax.nn.relu(
            jnp.dot(h2.astype(bf), p["w22"].astype(bf),
                    preferred_element_type=jnp.float32) + p["b22"])
        logits = jnp.dot(h3.astype(bf), p["w3"].astype(bf),
                         preferred_element_type=jnp.float32) + p["b3"]
        return jax.nn.softmax(logits, axis=1)

    assert jnp.allclose(out, ref(state, action, params), atol=3e-3)

    print("KERNEL_OK")
</pallas_src>

<mosaic_0001>
module attributes {stable_mosaic.version = 11 : i64} {
  func.func @_critic_kernel(%arg0: i32, %arg1: memref<16x16xbf16, #tpu.memory_space<vmem>>, %arg2: memref<16x8xf32, #tpu.memory_space<vmem>>, %arg3: memref<16x256xbf16, #tpu.memory_space<vmem>>, %arg4: memref<1x256xf32, #tpu.memory_space<vmem>>, %arg5: memref<256x256xbf16, #tpu.memory_space<vmem>>, %arg6: memref<8x256xf32, #tpu.memory_space<vmem>>, %arg7: memref<1x256xf32, #tpu.memory_space<vmem>>, %arg8: memref<256x256xbf16, #tpu.memory_space<vmem>>, %arg9: memref<1x256xf32, #tpu.memory_space<vmem>>, %arg10: memref<256x128xbf16, #tpu.memory_space<vmem>>, %arg11: memref<1x128xf32, #tpu.memory_space<vmem>>, %arg12: memref<16x128xbf16, #tpu.memory_space<vmem>>) attributes {dimension_semantics = [#tpu.dimension_semantics<parallel>], iteration_bounds = array<i64: 1>, scalar_prefetch = 0 : i64, scratch_operands = 0 : i64, tpu.core_type = #tpu.core_type<tc>, window_params = [{transform_indices = @transform_0, window_bounds = array<i64: 16, 16>}, {transform_indices = @transform_1, window_bounds = array<i64: 16, 8>}, {pipeline_mode = #tpu.pipeline_mode<synchronous>, transform_indices = @transform_2, window_bounds = array<i64: 16, 256>}, {pipeline_mode = #tpu.pipeline_mode<synchronous>, transform_indices = @transform_3, window_bounds = array<i64: 1, 256>}, {pipeline_mode = #tpu.pipeline_mode<synchronous>, transform_indices = @transform_4, window_bounds = array<i64: 256, 256>}, {pipeline_mode = #tpu.pipeline_mode<synchronous>, transform_indices = @transform_5, window_bounds = array<i64: 8, 256>}, {pipeline_mode = #tpu.pipeline_mode<synchronous>, transform_indices = @transform_6, window_bounds = array<i64: 1, 256>}, {pipeline_mode = #tpu.pipeline_mode<synchronous>, transform_indices = @transform_7, window_bounds = array<i64: 256, 256>}, {pipeline_mode = #tpu.pipeline_mode<synchronous>, transform_indices = @transform_8, window_bounds = array<i64: 1, 256>}, {pipeline_mode = #tpu.pipeline_mode<synchronous>, transform_indices = @transform_9, window_bounds = array<i64: 256, 128>}, {pipeline_mode = #tpu.pipeline_mode<synchronous>, transform_indices = @transform_10, window_bounds = array<i64: 1, 128>}, {transform_indices = @transform_11, window_bounds = array<i64: 16, 128>}]} {
    %c0 = arith.constant 0 : index
    %c0_0 = arith.constant 0 : index
    %0 = vector.load %arg1[%c0, %c0_0] : memref<16x16xbf16, #tpu.memory_space<vmem>>, vector<16x16xbf16>
    %c0_1 = arith.constant 0 : index
    %c0_2 = arith.constant 0 : index
    %1 = vector.load %arg3[%c0_1, %c0_2] : memref<16x256xbf16, #tpu.memory_space<vmem>>, vector<16x256xbf16>
    %cst = arith.constant dense<0.000000e+00> : vector<16x256xf32>
    %2 = tpu.matmul %0, %1, %cst {dimension_numbers = #tpu.dot_dimension_numbers<[1], [0], [0], [1], [0, 0, 1, 1], [], []>} : vector<16x16xbf16>, vector<16x256xbf16>, vector<16x256xf32> -> vector<16x256xf32>
    %c0_3 = arith.constant 0 : index
    %c0_4 = arith.constant 0 : index
    %3 = vector.load %arg4[%c0_3, %c0_4] : memref<1x256xf32, #tpu.memory_space<vmem>>, vector<1x256xf32>
    %4 = vector.broadcast %3 : vector<1x256xf32> to vector<16x256xf32>
    %5 = arith.addf %2, %4 : vector<16x256xf32>
    %cst_5 = arith.constant 0.000000e+00 : f32
    %6 = vector.broadcast %cst_5 : f32 to vector<16x256xf32>
    %7 = arith.maximumf %5, %6 : vector<16x256xf32>
    %8 = arith.truncf %7 : vector<16x256xf32> to vector<16x256xbf16>
    %c0_6 = arith.constant 0 : index
    %c0_7 = arith.constant 0 : index
    %9 = vector.load %arg2[%c0_6, %c0_7] : memref<16x8xf32, #tpu.memory_space<vmem>>, vector<16x8xf32>
    %c0_8 = arith.constant 0 : index
    %c0_9 = arith.constant 0 : index
    %10 = vector.load %arg6[%c0_8, %c0_9] : memref<8x256xf32, #tpu.memory_space<vmem>>, vector<8x256xf32>
    %cst_10 = arith.constant dense<0.000000e+00> : vector<16x256xf32>
    %11 = tpu.matmul %9, %10, %cst_10 {dimension_numbers = #tpu.dot_dimension_numbers<[1], [0], [0], [1], [0, 0, 1, 1], [], []>} : vector<16x8xf32>, vector<8x256xf32>, vector<16x256xf32> -> vector<16x256xf32>
    %c0_11 = arith.constant 0 : index
    %c0_12 = arith.constant 0 : index
    %12 = vector.load %arg5[%c0_11, %c0_12] : memref<256x256xbf16, #tpu.memory_space<vmem>>, vector<256x256xbf16>
    %cst_13 = arith.constant dense<0.000000e+00> : vector<16x256xf32>
    %13 = tpu.matmul %8, %12, %cst_13 {dimension_numbers = #tpu.dot_dimension_numbers<[1], [0], [0], [1], [0, 0, 1, 1], [], []>} : vector<16x256xbf16>, vector<256x256xbf16>, vector<16x256xf32> -> vector<16x256xf32>
    %14 = arith.addf %13, %11 : vector<16x256xf32>
    %c0_14 = arith.constant 0 : index
    %c0_15 = arith.constant 0 : index
    %15 = vector.load %arg7[%c0_14, %c0_15] : memref<1x256xf32, #tpu.memory_space<vmem>>, vector<1x256xf32>
    %16 = vector.broadcast %15 : vector<1x256xf32> to vector<16x256xf32>
    %17 = arith.addf %14, %16 : vector<16x256xf32>
    %cst_16 = arith.constant 0.000000e+00 : f32
    %18 = vector.broadcast %cst_16 : f32 to vector<16x256xf32>
    %19 = arith.maximumf %17, %18 : vector<16x256xf32>
    %20 = arith.truncf %19 : vector<16x256xf32> to vector<16x256xbf16>
    %c0_17 = arith.constant 0 : index
    %c0_18 = arith.constant 0 : index
    %21 = vector.load %arg8[%c0_17, %c0_18] : memref<256x256xbf16, #tpu.memory_space<vmem>>, vector<256x256xbf16>
    %cst_19 = arith.constant dense<0.000000e+00> : vector<16x256xf32>
    %22 = tpu.matmul %20, %21, %cst_19 {dimension_numbers = #tpu.dot_dimension_numbers<[1], [0], [0], [1], [0, 0, 1, 1], [], []>} : vector<16x256xbf16>, vector<256x256xbf16>, vector<16x256xf32> -> vector<16x256xf32>
    %c0_20 = arith.constant 0 : index
    %c0_21 = arith.constant 0 : index
    %23 = vector.load %arg9[%c0_20, %c0_21] : memref<1x256xf32, #tpu.memory_space<vmem>>, vector<1x256xf32>
    %24 = vector.broadcast %23 : vector<1x256xf32> to vector<16x256xf32>
    %25 = arith.addf %22, %24 : vector<16x256xf32>
    %cst_22 = arith.constant 0.000000e+00 : f32
    %26 = vector.broadcast %cst_22 : f32 to vector<16x256xf32>
    %27 = arith.maximumf %25, %26 : vector<16x256xf32>
    %28 = arith.truncf %27 : vector<16x256xf32> to vector<16x256xbf16>
    %c0_23 = arith.constant 0 : index
    %c0_24 = arith.constant 0 : index
    %29 = vector.load %arg10[%c0_23, %c0_24] : memref<256x128xbf16, #tpu.memory_space<vmem>>, vector<256x128xbf16>
    %cst_25 = arith.constant dense<0.000000e+00> : vector<16x128xf32>
    %30 = tpu.matmul %28, %29, %cst_25 {dimension_numbers = #tpu.dot_dimension_numbers<[1], [0], [0], [1], [0, 0, 1, 1], [], []>} : vector<16x256xbf16>, vector<256x128xbf16>, vector<16x128xf32> -> vector<16x128xf32>
    %c0_26 = arith.constant 0 : index
    %c0_27 = arith.constant 0 : index
    %31 = vector.load %arg11[%c0_26, %c0_27] : memref<1x128xf32, #tpu.memory_space<vmem>>, vector<1x128xf32>
    %32 = vector.broadcast %31 : vector<1x128xf32> to vector<16x128xf32>
    %33 = arith.addf %30, %32 : vector<16x128xf32>
    %cst_28 = arith.constant dense<0xFF800000> : vector<16xf32>
    %34 = vector.multi_reduction <maximumf>, %33, %cst_28 [1] : vector<16x128xf32> to vector<16xf32>
    %35 = vector.shape_cast %34 : vector<16xf32> to vector<16x1xf32>
    %36 = vector.broadcast %35 : vector<16x1xf32> to vector<16x128xf32>
    %37 = arith.subf %33, %36 : vector<16x128xf32>
    %38 = math.exp %37 : vector<16x128xf32>
    %cst_29 = arith.constant dense<0.000000e+00> : vector<16xf32>
    %39 = vector.multi_reduction <add>, %38, %cst_29 [1] : vector<16x128xf32> to vector<16xf32>
    %40 = vector.shape_cast %39 : vector<16xf32> to vector<16x1xf32>
    %41 = vector.broadcast %40 : vector<16x1xf32> to vector<16x128xf32>
    %42 = arith.divf %38, %41 : vector<16x128xf32>
    %43 = arith.truncf %42 : vector<16x128xf32> to vector<16x128xbf16>
    %c0_30 = arith.constant 0 : index
    %c0_31 = arith.constant 0 : index
    %44 = vector.load %arg12[%c0_30, %c0_31] : memref<16x128xbf16, #tpu.memory_space<vmem>>, vector<16x128xbf16>
    tpu.vector_store %arg12[%c0_30, %c0_31], %43 {strides = array<i32>} : memref<16x128xbf16, #tpu.memory_space<vmem>>, vector<16x128xbf16>,
    return
  }
  func.func @transform_0(%arg0: i32) -> (i32, i32) {
    %c0_i32 = arith.constant 0 : i32
    %c0_i32_0 = arith.constant 0 : i32
    return %arg0, %c0_i32 : i32, i32
  }
  func.func @transform_1(%arg0: i32) -> (i32, i32) {
    %c0_i32 = arith.constant 0 : i32
    %c0_i32_0 = arith.constant 0 : i32
    return %arg0, %c0_i32 : i32, i32
  }
  func.func @transform_2(%arg0: i32) -> (i32, i32) {
    %c0_i32 = arith.constant 0 : i32
    %c0_i32_0 = arith.constant 0 : i32
    %c0_i32_1 = arith.constant 0 : i32
    return %c0_i32, %c0_i32_0 : i32, i32
  }
  func.func @transform_3(%arg0: i32) -> (i32, i32) {
    %c0_i32 = arith.constant 0 : i32
    %c0_i32_0 = arith.constant 0 : i32
    %c0_i32_1 = arith.constant 0 : i32
    return %c0_i32, %c0_i32_0 : i32, i32
  }
  func.func @transform_4(%arg0: i32) -> (i32, i32) {
    %c0_i32 = arith.constant 0 : i32
    %c0_i32_0 = arith.constant 0 : i32
    %c0_i32_1 = arith.constant 0 : i32
    return %c0_i32, %c0_i32_0 : i32, i32
  }
  func.func @transform_5(%arg0: i32) -> (i32, i32) {
    %c0_i32 = arith.constant 0 : i32
    %c0_i32_0 = arith.constant 0 : i32
    %c0_i32_1 = arith.constant 0 : i32
    return %c0_i32, %c0_i32_0 : i32, i32
  }
  func.func @transform_6(%arg0: i32) -> (i32, i32) {
    %c0_i32 = arith.constant 0 : i32
    %c0_i32_0 = arith.constant 0 : i32
    %c0_i32_1 = arith.constant 0 : i32
    return %c0_i32, %c0_i32_0 : i32, i32
  }
  func.func @transform_7(%arg0: i32) -> (i32, i32) {
    %c0_i32 = arith.constant 0 : i32
    %c0_i32_0 = arith.constant 0 : i32
    %c0_i32_1 = arith.constant 0 : i32
    return %c0_i32, %c0_i32_0 : i32, i32
  }
  func.func @transform_8(%arg0: i32) -> (i32, i32) {
    %c0_i32 = arith.constant 0 : i32
    %c0_i32_0 = arith.constant 0 : i32
    %c0_i32_1 = arith.constant 0 : i32
    return %c0_i32, %c0_i32_0 : i32, i32
  }
  func.func @transform_9(%arg0: i32) -> (i32, i32) {
    %c0_i32 = arith.constant 0 : i32
    %c0_i32_0 = arith.constant 0 : i32
    %c0_i32_1 = arith.constant 0 : i32
    return %c0_i32, %c0_i32_0 : i32, i32
  }
  func.func @transform_10(%arg0: i32) -> (i32, i32) {
    %c0_i32 = arith.constant 0 : i32
    %c0_i32_0 = arith.constant 0 : i32
    %c0_i32_1 = arith.constant 0 : i32
    return %c0_i32, %c0_i32_0 : i32, i32
  }
  func.func @transform_11(%arg0: i32) -> (i32, i32) {
    %c0_i32 = arith.constant 0 : i32
    %c0_i32_0 = arith.constant 0 : i32
    return %arg0, %c0_i32 : i32, i32
  }
}

</mosaic_0001>

<llo_original>
// kernel: critic_forward.1
$region0: #{critic_forward.1}
  #allocation0 [shape = 'u32[]', space=smem, size = 0x4, offset = 0x4, fixed_abs, tag = 'smem constant byte address 0x4 - core index']
  #allocation1 [shape = 'u32[144,128]{1,0:T(1,128)}', space=vmem, size = 0x12000, scoped, tag = 'internal scratch']
  %s0 = inlined_call_operand.vmem [shape: bf16[16,16], index: 0, kind: input, shape index: {}]
  %s1 = inlined_call_operand.vmem [shape: f32[16,8], index: 1, kind: input, shape index: {}]
  %s2 = inlined_call_operand.vmem [shape: bf16[16,256], index: 2, kind: input, shape index: {}]
  %s3 = inlined_call_operand.vmem [shape: f32[1,256], index: 3, kind: input, shape index: {}]
  %s4 = inlined_call_operand.hbm [shape: bf16[256,256], index: 4, kind: input, shape index: {}]
  %s5 = inlined_call_operand.vmem [shape: f32[8,256], index: 5, kind: input, shape index: {}]
  %s6 = inlined_call_operand.vmem [shape: f32[1,256], index: 6, kind: input, shape index: {}]
  %s7 = inlined_call_operand.hbm [shape: bf16[256,256], index: 7, kind: input, shape index: {}]
  %s8 = inlined_call_operand.vmem [shape: f32[1,256], index: 8, kind: input, shape index: {}]
  %s9 = inlined_call_operand.hbm [shape: bf16[256,128], index: 9, kind: input, shape index: {}]
  %s10 = inlined_call_operand.vmem [shape: f32[1,128], index: 10, kind: input, shape index: {}]
  %s11 = inlined_call_operand.vmem [shape: bf16[16,128], index: 11, kind: output, shape index: {}]
  %s12 = sld [smem:[#allocation0]]
  $region66: #{critic_forward.1} parent=0
    _
  %s14 = ssub.s32 1, %s12
  %s15 = scalar_select 0, %s14, %s12
  $region1: #{critic_forward.1} parent=0
    #allocation2 [shape = 'u8[131072]{0}', space=vmem, size = 0x20000, scoped, tag = 'input window, operand 4, single buffered']
    #allocation3 [shape = 's32[1]{0}', space=sflag, size = 0x4, scoped, tag = 'scoped memory for critic_forward.1']
    #allocation4 [shape = 'u8[131072]{0}', space=vmem, size = 0x20000, scoped, tag = 'input window, operand 7, single buffered']
    #allocation5 [shape = 's32[1]{0}', space=sflag, size = 0x4, scoped, tag = 'scoped memory for critic_forward.1']
    #allocation6 [shape = 'u8[65536]{0}', space=vmem, size = 0x10000, scoped, tag = 'input window, operand 9, single buffered']
    %16 = vsyncpa [#allocation3], 0
    %17 = vsyncpa [#allocation5], 0
    // Predicated region
    $region2: #{critic_forward.1} parent=1 // pred_check
      _
    $region3: #{critic_forward.1} parent=1 // pred_check_branch
      %19 = sbr.rel (0) target = $region5
    $region4: #{critic_forward.1} parent=1 // pred_region
      _
    $region5: #{critic_forward.1} parent=1 // pred_fallthru
      _
    // Predicated region
    $region6: #{critic_forward.1} parent=1 // pred_check
      _
    $region7: #{critic_forward.1} parent=1 // pred_check_branch
      %21 = sbr.rel (0) target = $region9
    $region8: #{critic_forward.1} parent=1 // pred_region
      _
    $region9: #{critic_forward.1} parent=1 // pred_fallthru
      _
    // Predicated region
    $region10: #{critic_forward.1} parent=1 // pred_check
      _
    $region11: #{critic_forward.1} parent=1 // pred_check_branch
      %23 = sbr.rel (0) target = $region13
    $region12: #{critic_forward.1} parent=1 // pred_region
      _
    $region13: #{critic_forward.1} parent=1 // pred_fallthru
      _
    // Predicated region
    $region14: #{critic_forward.1} parent=1 // pred_check
      _
    $region15: #{critic_forward.1} parent=1 // pred_check_branch
      %25 = sbr.rel (0) target = $region17
    $region16: #{critic_forward.1} parent=1 // pred_region
      _
    $region17: #{critic_forward.1} parent=1 // pred_fallthru
      _
    // Predicated region
    $region18: #{critic_forward.1} parent=1 // pred_check
      _
    $region19: #{critic_forward.1} parent=1 // pred_check_branch
      %27 = sbr.rel (0) target = $region21
    $region20: #{critic_forward.1} parent=1 // pred_region
      %s29 = ssub.s32 4096, 4096
      %30 = vsyncadd [#allocation3], %s29
      %s31 = sshll.u32 [#allocation2], 4
      %s32 = int_to_ptr.vmem [resolvable:$true] %s31
      %37 = dma.hbm_to_vmem [thread:$0]  %s4, 4096, %s32, [#allocation3], 128, 128, 8
    $region21: #{critic_forward.1} parent=1 // pred_fallthru
      _
    // Predicated region
    $region22: #{critic_forward.1} parent=1 // pred_check
      _
    $region23: #{critic_forward.1} parent=1 // pred_check_branch
      %39 = sbr.rel (0) target = $region25
    $region24: #{critic_forward.1} parent=1 // pred_region
      _
    $region25: #{critic_forward.1} parent=1 // pred_fallthru
      _
    // Predicated region
    $region26: #{critic_forward.1} parent=1 // pred_check
      _
    $region27: #{critic_forward.1} parent=1 // pred_check_branch
      %41 = sbr.rel (0) target = $region29
    $region28: #{critic_forward.1} parent=1 // pred_region
      _
    $region29: #{critic_forward.1} parent=1 // pred_fallthru
      _
    // Predicated region
    $region30: #{critic_forward.1} parent=1 // pred_check
      _
    $region31: #{critic_forward.1} parent=1 // pred_check_branch
      %43 = sbr.rel (0) target = $region33
    $region32: #{critic_forward.1} parent=1 // pred_region
      %s45 = ssub.s32 4096, 4096
      %46 = vsyncadd [#allocation5], %s45
      %s47 = sshll.u32 [#allocation4], 4
      %s48 = int_to_ptr.vmem [resolvable:$true] %s47
      %53 = dma.hbm_to_vmem [thread:$0]  %s7, 4096, %s48, [#allocation5], 128, 128, 8
    $region33: #{critic_forward.1} parent=1 // pred_fallthru
      _
    // Predicated region
    $region34: #{critic_forward.1} parent=1 // pred_check
      _
    $region35: #{critic_forward.1} parent=1 // pred_check_branch
      %55 = sbr.rel (0) target = $region37
    $region36: #{critic_forward.1} parent=1 // pred_region
      _
    $region37: #{critic_forward.1} parent=1 // pred_fallthru
      _
    // Predicated region
    $region38: #{critic_forward.1} parent=1 // pred_check
      _
    $region39: #{critic_forward.1} parent=1 // pred_check_branch
      %57 = sbr.rel (0) target = $region41
    $region40: #{critic_forward.1} parent=1 // pred_region
      %s59 = ssub.s32 2048, 2048
      %60 = vsyncadd [#allocation5], %s59
      %s61 = sshll.u32 [#allocation6], 4
      %s62 = int_to_ptr.vmem [resolvable:$true] %s61
      %67 = dma.hbm_to_vmem [thread:$0]  %s9, 2048, %s62, [#allocation5], 64, 64, 4
    $region41: #{critic_forward.1} parent=1 // pred_fallthru
      _
    // Predicated region
    $region42: #{critic_forward.1} parent=1 // pred_check
      _
    $region43: #{critic_forward.1} parent=1 // pred_check_branch
      %69 = sbr.rel (0) target = $region45
    $region44: #{critic_forward.1} parent=1 // pred_region
      _
    $region45: #{critic_forward.1} parent=1 // pred_fallthru
      _
    // Predicated region
    $region46: #{critic_forward.1} parent=1 // pred_check
      _
    $region47: #{critic_forward.1} parent=1 // pred_check_branch
      %71 = sbr.rel (0) target = $region49
    $region48: #{critic_forward.1} parent=1 // pred_region
      %72 = dma.done [#allocation3], 4096
    $region49: #{critic_forward.1} parent=1 // pred_fallthru
      _
    // Predicated region
    $region50: #{critic_forward.1} parent=1 // pred_check
      _
    $region51: #{critic_forward.1} parent=1 // pred_check_branch
      %74 = sbr.rel (0) target = $region53
    $region52: #{critic_forward.1} parent=1 // pred_region
      %75 = dma.done [#allocation5], 4096
    $region53: #{critic_forward.1} parent=1 // pred_fallthru
      _
    // Predicated region
    $region54: #{critic_forward.1} parent=1 // pred_check
      _
    $region55: #{critic_forward.1} parent=1 // pred_check_branch
      %77 = sbr.rel (0) target = $region57
    $region56: #{critic_forward.1} parent=1 // pred_region
      %78 = dma.done [#allocation5], 2048
    $region57: #{critic_forward.1} parent=1 // pred_fallthru
      _
    %v80 = vld [vmem:[%s0] sm:$0xf]
    %v81 = vld [vmem:[%s0 + $0x4] sm:$0xf]
    %v82 = vld [vmem:[%s2] sm:$0xff]
    %v83 = vld [vmem:[%s2 + $0x8] sm:$0xff]
    %v84 = vld [vmem:[%s3] sm:$0x3]
    %v86 = vlaneseq
    %v87 = vshrl.u32 %v86, 7
    %v88 = vsub.s32 0, %v87
    %v89 = vrot.slane %v84, %v88
    %v90 = vlaneseq
    %v91 = vshrl.u32 %v90, 7
    %v92 = vsub.s32 1, %v91
    %v93 = vrot.slane %v84, %v92
    %v98 = vunpack.c.l.b16 %v80
    %v99 = vunpack.c.l.b16 %v81
    %v100 = vpack.c.b16 %v99, %v98
    %v103 = vunpack.c.l.b16 %v82
    %v104 = vunpack.c.h.b16 %v82
    %v105 = vunpack.c.l.b16 %v83
    %v106 = vunpack.c.h.b16 %v83
    %v107 = vpack.c.b16 %v105, %v103
    %v108 = vpack.c.b16 %v106, %v104
    %vm111 = vcmask 130048
    %v113 = vsel %vm111, %v100, 0
    %115 = vmatprep.subr.bf16.mxu0 %v108
    %116 = vmatpush1.bf16.msra.mxu0 %v107
    %117 = vmatprep.subr.bf16.mxu0 0
    %118 = vmatpush1.bf16.msra.mxu0 0
    %119 = vmatprep.subr.bf16.mxu0 0
    %120 = vmatpush1.bf16.msra.mxu0 0
    %121 = vmatprep.subr.bf16.mxu0 0
    %122 = vmatpush1.bf16.msra.mxu0 0
    %123 = vmatprep.subr.bf16.mxu0 0
    %124 = vmatpush1.bf16.msra.mxu0 0
    %125 = vmatprep.subr.bf16.mxu0 0
    %126 = vmatpush1.bf16.msra.mxu0 0
    %127 = vmatprep.subr.bf16.mxu0 0
    %128 = vmatpush1.bf16.msra.mxu0 0
    %129 = vmatprep.subr.bf16.mxu0 0
    %130 = vmatpush1.bf16.msra.mxu0 0
    %131 = vmatprep.subr.bf16.mxu0 0
    %132 = vmatpush1.bf16.msra.mxu0 0
    %133 = vmatprep.subr.bf16.mxu0 0
    %134 = vmatpush1.bf16.msra.mxu0 0
    %135 = vmatprep.subr.bf16.mxu0 0
    %136 = vmatpush1.bf16.msra.mxu0 0
    %137 = vmatprep.subr.bf16.mxu0 0
    %138 = vmatpush1.bf16.msra.mxu0 0
    %139 = vmatprep.subr.bf16.mxu0 0
    %140 = vmatpush1.bf16.msra.mxu0 0
    %141 = vmatprep.subr.bf16.mxu0 0
    %142 = vmatpush1.bf16.msra.mxu0 0
    %143 = vmatprep.subr.bf16.mxu0 0
    %144 = vmatpush1.bf16.msra.mxu0 0
    %145 = vmatprep.subr.bf16.mxu0 0
    %146 = vmatpush1.bf16.msra.mxu0 0
    %147 = vmatprep.mubr.bf16.mxu0 0
    %148 = vmatmul.mubr.bf16.gmra.mrb[0].mxu0 %v113
    %v149 = vpop.f32.mrb[0].mxu0
    %v150 = vadd.f32 %v89, %v149
    %v151 = vpop.f32.mrb[0].mxu0
    %v152 = vadd.f32 %v93, %v151
    %v153 = vpop.f32.mrb[0].mxu0
    %v154 = vadd.f32 %v89, %v153
    %v155 = vpop.f32.mrb[0].mxu0
    %v156 = vadd.f32 %v93, %v155
    %157 = vdwg.mxu0
    %v158 = vmax.f32 %v150, 0.0
    %v159 = vmax.f32 %v152, 0.0
    %v160 = vmax.f32 %v154, 0.0
    %v161 = vmax.f32 %v156, 0.0
    %v162 = vpack.c.bf16 %v160, %v158
    %v163 = vpack.c.bf16 %v161, %v159
    %v164 = vld [vmem:[%s1] sm:$0xff]
    %v165 = vld [vmem:[%s1 + $0x8] sm:$0xff]
    %v166 = vld [vmem:[%s5] sm:$0xff]
    %v167 = vld [vmem:[%s5 + $0x8] sm:$0xff]
    %vm168 = vcmask 64512
    %v170 = vsel %vm168, %v164, 0
    %v173 = vsel %vm168, %v165, 0
    %175 = vmatprep.subr.mxu0 %v167
    %176 = vmatpush1.msra.mxu0 %v166
    %177 = vmatprep.subr.mxu0 0.0
    %178 = vmatpush1.msra.mxu0 0.0
    %179 = vmatprep.subr.mxu0 0.0
    %180 = vmatpush1.msra.mxu0 0.0
    %181 = vmatprep.subr.mxu0 0.0
    %182 = vmatpush1.msra.mxu0 0.0
    %183 = vmatprep.subr.mxu0 0.0
    %184 = vmatpush1.msra.mxu0 0.0
    %185 = vmatprep.subr.mxu0 0.0
    %186 = vmatpush1.msra.mxu0 0.0
    %187 = vmatprep.subr.mxu0 0.0
    %188 = vmatpush1.msra.mxu0 0.0
    %189 = vmatprep.subr.mxu0 0.0
    %190 = vmatpush1.msra.mxu0 0.0
    %191 = vmatprep.subr.mxu0 0.0
    %192 = vmatpush1.msra.mxu0 0.0
    %193 = vmatprep.subr.mxu0 0.0
    %194 = vmatpush1.msra.mxu0 0.0
    %195 = vmatprep.subr.mxu0 0.0
    %196 = vmatpush1.msra.mxu0 0.0
    %197 = vmatprep.subr.mxu0 0.0
    %198 = vmatpush1.msra.mxu0 0.0
    %199 = vmatprep.subr.mxu0 0.0
    %200 = vmatpush1.msra.mxu0 0.0
    %201 = vmatprep.subr.mxu0 0.0
    %202 = vmatpush1.msra.mxu0 0.0
    %203 = vmatprep.subr.mxu0 0.0
    %204 = vmatpush1.msra.mxu0 0.0
    %205 = vmatprep.subr.mxu0 0.0
    %206 = vmatpush1.msra.mxu0 0.0
    %207 = vmatprep.subr.mxu0 0.0
    %208 = vmatpush1.msra.mxu0 0.0
    %209 = vmatprep.subr.mxu0 0.0
    %210 = vmatpush1.msra.mxu0 0.0
    %211 = vmatprep.subr.mxu0 0.0
    %212 = vmatpush1.msra.mxu0 0.0
    %213 = vmatprep.subr.mxu0 0.0
    %214 = vmatpush1.msra.mxu0 0.0
    %215 = vmatprep.subr.mxu0 0.0
    %216 = vmatpush1.msra.mxu0 0.0
    %217 = vmatprep.subr.mxu0 0.0
    %218 = vmatpush1.msra.mxu0 0.0
    %219 = vmatprep.subr.mxu0 0.0
    %220 = vmatpush1.msra.mxu0 0.0
    %221 = vmatprep.subr.mxu0 0.0
    %222 = vmatpush1.msra.mxu0 0.0
    %223 = vmatprep.subr.mxu0 0.0
    %224 = vmatpush1.msra.mxu0 0.0
    %225 = vmatprep.subr.mxu0 0.0
    %226 = vmatpush1.msra.mxu0 0.0
    %227 = vmatprep.subr.mxu0 0.0
    %228 = vmatpush1.msra.mxu0 0.0
    %229 = vmatprep.subr.mxu0 0.0
    %230 = vmatpush1.msra.mxu0 0.0
    %231 = vmatprep.subr.mxu0 0.0
    %232 = vmatpush1.msra.mxu0 0.0
    %233 = vmatprep.subr.mxu0 0.0
    %234 = vmatpush1.msra.mxu0 0.0
    %235 = vmatprep.subr.mxu0 0.0
    %236 = vmatpush1.msra.mxu0 0.0
    %237 = vmatprep.subr.mxu0 0.0
    %238 = vmatpush1.msra.mxu0 0.0
    %239 = vmatprep.mubr.f32.mxu0 0.0
    %240 = vmatmul.mubr.f32.gmra.mrb[0].mxu0 %v170
    %v241 = vpop.f32.mrb[0].mxu0
    %v242 = vadd.f32 0.0, %v241
    %v243 = vpop.f32.mrb[0].mxu0
    %v244 = vadd.f32 0.0, %v243
    %245 = vmatprep.mubr.f32.mxu0 0.0
    %246 = vmatmul.mubr.f32.gmra.mrb[0].mxu0 %v173
    %v247 = vpop.f32.mrb[0].mxu0
    %v248 = vadd.f32 0.0, %v247
    %v249 = vpop.f32.mrb[0].mxu0
    %v250 = vadd.f32 0.0, %v249
    %251 = vdwg.mxu0
    %v252 = vld [vmem:[#allocation2] sm:$0xff]
    %v253 = vld [vmem:[#allocation2 + $0x8] sm:$0xff]
    %v254 = vld [vmem:[#allocation2 + $0x10] sm:$0xff]
    %v255 = vld [vmem:[#allocation2 + $0x18] sm:$0xff]
    %v256 = vld [vmem:[#allocation2 + $0x20] sm:$0xff]
    %v257 = vld [vmem:[#allocation2 + $0x28] sm:$0xff]
    %v258 = vld [vmem:[#allocation2 + $0x30] sm:$0xff]
    %v259 = vld [vmem:[#allocation2 + $0x38] sm:$0xff]
    %v260 = vld [vmem:[#allocation2 + $0x40] sm:$0xff]
    %v261 = vld [vmem:[#allocation2 + $0x48] sm:$0xff]
    %v262 = vld [vmem:[#allocation2 + $0x50] sm:$0xff]
    %v263 = vld [vmem:[#allocation2 + $0x58] sm:$0xff]
    %v264 = vld [vmem:[#allocation2 + $0x60] sm:$0xff]
    %v265 = vld [vmem:[#allocation2 + $0x68] sm:$0xff]
    %v266 = vld [vmem:[#allocation2 + $0x70] sm:$0xff]
    %v267 = vld [vmem:[#allocation2 + $0x78] sm:$0xff]
    %v268 = vld [vmem:[#allocation2 + $0x80] sm:$0xff]
    %v269 = vld [vmem:[#allocation2 + $0x88] sm:$0xff]
    %v270 = vld [vmem:[#allocation2 + $0x90] sm:$0xff]
    %v271 = vld [vmem:[#allocation2 + $0x98] sm:$0xff]
    %v272 = vld [vmem:[#allocation2 + $0xa0] sm:$0xff]
    %v273 = vld [vmem:[#allocation2 + $0xa8] sm:$0xff]
    %v274 = vld [vmem:[#allocation2 + $0xb0] sm:$0xff]
    %v275 = vld [vmem:[#allocation2 + $0xb8] sm:$0xff]
    %v276 = vld [vmem:[#allocation2 + $0xc0] sm:$0xff]
    %v277 = vld [vmem:[#allocation2 + $0xc8] sm:$0xff]
    %v278 = vld [vmem:[#allocation2 + $0xd0] sm:$0xff]
    %v279 = vld [vmem:[#allocation2 + $0xd8] sm:$0xff]
    %v280 = vld [vmem:[#allocation2 + $0xe0] sm:$0xff]
    %v281 = vld [vmem:[#allocation2 + $0xe8] sm:$0xff]
    %v282 = vld [vmem:[#allocation2 + $0xf0] sm:$0xff]
    %v283 = vld [vmem:[#allocation2 + $0xf8] sm:$0xff]
    %v316 = vunpack.c.l.b16 %v252
    %v317 = vunpack.c.h.b16 %v252
    %v318 = vunpack.c.l.b16 %v253
    %v319 = vunpack.c.h.b16 %v253
    %v320 = vunpack.c.l.b16 %v254
    %v321 = vunpack.c.h.b16 %v254
    %v322 = vunpack.c.l.b16 %v255
    %v323 = vunpack.c.h.b16 %v255
    %v324 = vunpack.c.l.b16 %v256
    %v325 = vunpack.c.h.b16 %v256
    %v326 = vunpack.c.l.b16 %v257
    %v327 = vunpack.c.h.b16 %v257
    %v328 = vunpack.c.l.b16 %v258
    %v329 = vunpack.c.h.b16 %v258
    %v330 = vunpack.c.l.b16 %v259
    %v331 = vunpack.c.h.b16 %v259
    %v332 = vunpack.c.l.b16 %v260
    %v333 = vunpack.c.h.b16 %v260
    %v334 = vunpack.c.l.b16 %v261
    %v335 = vunpack.c.h.b16 %v261
    %v336 = vunpack.c.l.b16 %v262
    %v337 = vunpack.c.h.b16 %v262
    %v338 = vunpack.c.l.b16 %v263
    %v339 = vunpack.c.h.b16 %v263
    %v340 = vunpack.c.l.b16 %v264
    %v341 = vunpack.c.h.b16 %v264
    %v342 = vunpack.c.l.b16 %v265
    %v343 = vunpack.c.h.b16 %v265
    %v344 = vunpack.c.l.b16 %v266
    %v345 = vunpack.c.h.b16 %v266
    %v346 = vunpack.c.l.b16 %v267
    %v347 = vunpack.c.h.b16 %v267
    %v348 = vunpack.c.l.b16 %v268
    %v349 = vunpack.c.h.b16 %v268
    %v350 = vunpack.c.l.b16 %v269
    %v351 = vunpack.c.h.b16 %v269
    %v352 = vunpack.c.l.b16 %v270
    %v353 = vunpack.c.h.b16 %v270
    %v354 = vunpack.c.l.b16 %v271
    %v355 = vunpack.c.h.b16 %v271
    %v356 = vunpack.c.l.b16 %v272
    %v357 = vunpack.c.h.b16 %v272
    %v358 = vunpack.c.l.b16 %v273
    %v359 = vunpack.c.h.b16 %v273
    %v360 = vunpack.c.l.b16 %v274
    %v361 = vunpack.c.h.b16 %v274
    %v362 = vunpack.c.l.b16 %v275
    %v363 = vunpack.c.h.b16 %v275
    %v364 = vunpack.c.l.b16 %v276
    %v365 = vunpack.c.h.b16 %v276
    %v366 = vunpack.c.l.b16 %v277
    %v367 = vunpack.c.h.b16 %v277
    %v368 = vunpack.c.l.b16 %v278
    %v369 = vunpack.c.h.b16 %v278
    %v370 = vunpack.c.l.b16 %v279
    %v371 = vunpack.c.h.b16 %v279
    %v372 = vunpack.c.l.b16 %v280
    %v373 = vunpack.c.h.b16 %v280
    %v374 = vunpack.c.l.b16 %v281
    %v375 = vunpack.c.h.b16 %v281
    %v376 = vunpack.c.l.b16 %v282
    %v377 = vunpack.c.h.b16 %v282
    %v378 = vunpack.c.l.b16 %v283
    %v379 = vunpack.c.h.b16 %v283
    %v380 = vpack.c.b16 %v318, %v316
    %v381 = vpack.c.b16 %v319, %v317
    %v382 = vpack.c.b16 %v322, %v320
    %v383 = vpack.c.b16 %v323, %v321
    %v384 = vpack.c.b16 %v326, %v324
    %v385 = vpack.c.b16 %v327, %v325
    %v386 = vpack.c.b16 %v330, %v328
    %v387 = vpack.c.b16 %v331, %v329
    %v388 = vpack.c.b16 %v334, %v332
    %v389 = vpack.c.b16 %v335, %v333
    %v390 = vpack.c.b16 %v338, %v336
    %v391 = vpack.c.b16 %v339, %v337
    %v392 = vpack.c.b16 %v342, %v340
    %v393 = vpack.c.b16 %v343, %v341
    %v394 = vpack.c.b16 %v346, %v344
    %v395 = vpack.c.b16 %v347, %v345
    %v396 = vpack.c.b16 %v350, %v348
    %v397 = vpack.c.b16 %v351, %v349
    %v398 = vpack.c.b16 %v354, %v352
    %v399 = vpack.c.b16 %v355, %v353
    %v400 = vpack.c.b16 %v358, %v356
    %v401 = vpack.c.b16 %v359, %v357
    %v402 = vpack.c.b16 %v362, %v360
    %v403 = vpack.c.b16 %v363, %v361
    %v404 = vpack.c.b16 %v366, %v364
    %v405 = vpack.c.b16 %v367, %v365
    %v406 = vpack.c.b16 %v370, %v368
    %v407 = vpack.c.b16 %v371, %v369
    %v408 = vpack.c.b16 %v374, %v372
    %v409 = vpack.c.b16 %v375, %v373
    %v410 = vpack.c.b16 %v378, %v376
    %v411 = vpack.c.b16 %v379, %v377
    %444 = vmatprep.subr.bf16.mxu0 %v381
    %445 = vmatpush1.bf16.msra.mxu0 %v380
    %446 = vmatprep.subr.bf16.mxu0 %v383
    %447 = vmatpush1.bf16.msra.mxu0 %v382
    %448 = vmatprep.subr.bf16.mxu0 %v385
    %449 = vmatpush1.bf16.msra.mxu0 %v384
    %450 = vmatprep.subr.bf16.mxu0 %v387
    %451 = vmatpush1.bf16.msra.mxu0 %v386
    %452 = vmatprep.subr.bf16.mxu0 %v389
    %453 = vmatpush1.bf16.msra.mxu0 %v388
    %454 = vmatprep.subr.bf16.mxu0 %v391
    %455 = vmatpush1.bf16.msra.mxu0 %v390
    %456 = vmatprep.subr.bf16.mxu0 %v393
    %457 = vmatpush1.bf16.msra.mxu0 %v392
    %458 = vmatprep.subr.bf16.mxu0 %v395
    %459 = vmatpush1.bf16.msra.mxu0 %v394
    %460 = vmatprep.subr.bf16.mxu0 %v397
    %461 = vmatpush1.bf16.msra.mxu0 %v396
    %462 = vmatprep.subr.bf16.mxu0 %v399
    %463 = vmatpush1.bf16.msra.mxu0 %v398
    %464 = vmatprep.subr.bf16.mxu0 %v401
    %465 = vmatpush1.bf16.msra.mxu0 %v400
    %466 = vmatprep.subr.bf16.mxu0 %v403
    %467 = vmatpush1.bf16.msra.mxu0 %v402
    %468 = vmatprep.subr.bf16.mxu0 %v405
    %469 = vmatpush1.bf16.msra.mxu0 %v404
    %470 = vmatprep.subr.bf16.mxu0 %v407
    %471 = vmatpush1.bf16.msra.mxu0 %v406
    %472 = vmatprep.subr.bf16.mxu0 %v409
    %473 = vmatpush1.bf16.msra.mxu0 %v408
    %474 = vmatprep.subr.bf16.mxu0 %v411
    %475 = vmatpush1.bf16.msra.mxu0 %v410
    %476 = vmatprep.mubr.bf16.mxu0 %v163
    %477 = vmatmul.mubr.bf16.gmra.mrb[0].mxu0 %v162
    %v478 = vpop.f32.mrb[0].mxu0
    %v479 = vadd.f32 %v242, %v478
    %v480 = vpop.f32.mrb[0].mxu0
    %v481 = vadd.f32 %v244, %v480
    %v482 = vpop.f32.mrb[0].mxu0
    %v483 = vadd.f32 %v248, %v482
    %v484 = vpop.f32.mrb[0].mxu0
    %v485 = vadd.f32 %v250, %v484
    %486 = vdwg.mxu0
    %v487 = vld [vmem:[%s6] sm:$0x3]
    %v489 = vlaneseq
    %v490 = vshrl.u32 %v489, 7
    %v491 = vsub.s32 0, %v490
    %v492 = vrot.slane %v487, %v491
    %v493 = vlaneseq
    %v494 = vshrl.u32 %v493, 7
    %v495 = vsub.s32 1, %v494
    %v496 = vrot.slane %v487, %v495
    %v499 = vadd.f32 %v479, %v492
    %v500 = vadd.f32 %v481, %v496
    %v501 = vadd.f32 %v483, %v492
    %v502 = vadd.f32 %v485, %v496
    %v503 = vmax.f32 %v499, 0.0
    %v504 = vmax.f32 %v500, 0.0
    %v505 = vmax.f32 %v501, 0.0
    %v506 = vmax.f32 %v502, 0.0
    %v507 = vpack.c.bf16 %v505, %v503
    %v508 = vpack.c.bf16 %v506, %v504
    %v509 = vld [vmem:[#allocation4] sm:$0xff]
    %v510 = vld [vmem:[#allocation4 + $0x8] sm:$0xff]
    %v511 = vld [vmem:[#allocation4 + $0x10] sm:$0xff]
    %v512 = vld [vmem:[#allocation4 + $0x18] sm:$0xff]
    %v513 = vld [vmem:[#allocation4 + $0x20] sm:$0xff]
    %v514 = vld [vmem:[#allocation4 + $0x28] sm:$0xff]
    %v515 = vld [vmem:[#allocation4 + $0x30] sm:$0xff]
    %v516 = vld [vmem:[#allocation4 + $0x38] sm:$0xff]
    %v517 = vld [vmem:[#allocation4 + $0x40] sm:$0xff]
    %v518 = vld [vmem:[#allocation4 + $0x48] sm:$0xff]
    %v519 = vld [vmem:[#allocation4 + $0x50] sm:$0xff]
    %v520 = vld [vmem:[#allocation4 + $0x58] sm:$0xff]
    %v521 = vld [vmem:[#allocation4 + $0x60] sm:$0xff]
    %v522 = vld [vmem:[#allocation4 + $0x68] sm:$0xff]
    %v523 = vld [vmem:[#allocation4 + $0x70] sm:$0xff]
    %v524 = vld [vmem:[#allocation4 + $0x78] sm:$0xff]
    %v525 = vld [vmem:[#allocation4 + $0x80] sm:$0xff]
    %v526 = vld [vmem:[#allocation4 + $0x88] sm:$0xff]
    %v527 = vld [vmem:[#allocation4 + $0x90] sm:$0xff]
    %v528 = vld [vmem:[#allocation4 + $0x98] sm:$0xff]
    %v529 = vld [vmem:[#allocation4 + $0xa0] sm:$0xff]
    %v530 = vld [vmem:[#allocation4 + $0xa8] sm:$0xff]
    %v531 = vld [vmem:[#allocation4 + $0xb0] sm:$0xff]
    %v532 = vld [vmem:[#allocation4 + $0xb8] sm:$0xff]
    %v533 = vld [vmem:[#allocation4 + $0xc0] sm:$0xff]
    %v534 = vld [vmem:[#allocation4 + $0xc8] sm:$0xff]
    %v535 = vld [vmem:[#allocation4 + $0xd0] sm:$0xff]
    %v536 = vld [vmem:[#allocation4 + $0xd8] sm:$0xff]
    %v537 = vld [vmem:[#allocation4 + $0xe0] sm:$0xff]
    %v538 = vld [vmem:[#allocation4 + $0xe8] sm:$0xff]
    %v539 = vld [vmem:[#allocation4 + $0xf0] sm:$0xff]
    %v540 = vld [vmem:[#allocation4 + $0xf8] sm:$0xff]
    %v541 = vld [vmem:[%s8] sm:$0x3]
    %v543 = vlaneseq
    %v544 = vshrl.u32 %v543, 7
    %v545 = vsub.s32 0, %v544
    %v546 = vrot.slane %v541, %v545
    %v547 = vlaneseq
    %v548 = vshrl.u32 %v547, 7
    %v549 = vsub.s32 1, %v548
    %v550 = vrot.slane %v541, %v549
    %v585 = vunpack.c.l.b16 %v509
    %v586 = vunpack.c.h.b16 %v509
    %v587 = vunpack.c.l.b16 %v510
    %v588 = vunpack.c.h.b16 %v510
    %v589 = vunpack.c.l.b16 %v511
    %v590 = vunpack.c.h.b16 %v511
    %v591 = vunpack.c.l.b16 %v512
    %v592 = vunpack.c.h.b16 %v512
    %v593 = vunpack.c.l.b16 %v513
    %v594 = vunpack.c.h.b16 %v513
    %v595 = vunpack.c.l.b16 %v514
    %v596 = vunpack.c.h.b16 %v514
    %v597 = vunpack.c.l.b16 %v515
    %v598 = vunpack.c.h.b16 %v515
    %v599 = vunpack.c.l.b16 %v516
    %v600 = vunpack.c.h.b16 %v516
    %v601 = vunpack.c.l.b16 %v517
    %v602 = vunpack.c.h.b16 %v517
    %v603 = vunpack.c.l.b16 %v518
    %v604 = vunpack.c.h.b16 %v518
    %v605 = vunpack.c.l.b16 %v519
    %v606 = vunpack.c.h.b16 %v519
    %v607 = vunpack.c.l.b16 %v520
    %v608 = vunpack.c.h.b16 %v520
    %v609 = vunpack.c.l.b16 %v521
    %v610 = vunpack.c.h.b16 %v521
    %v611 = vunpack.c.l.b16 %v522
    %v612 = vunpack.c.h.b16 %v522
    %v613 = vunpack.c.l.b16 %v523
    %v614 = vunpack.c.h.b16 %v523
    %v615 = vunpack.c.l.b16 %v524
    %v616 = vunpack.c.h.b16 %v524
    %v617 = vunpack.c.l.b16 %v525
    %v618 = vunpack.c.h.b16 %v525
    %v619 = vunpack.c.l.b16 %v526
    %v620 = vunpack.c.h.b16 %v526
    %v621 = vunpack.c.l.b16 %v527
    %v622 = vunpack.c.h.b16 %v527
    %v623 = vunpack.c.l.b16 %v528
    %v624 = vunpack.c.h.b16 %v528
    %v625 = vunpack.c.l.b16 %v529
    %v626 = vunpack.c.h.b16 %v529
    %v627 = vunpack.c.l.b16 %v530
    %v628 = vunpack.c.h.b16 %v530
    %v629 = vunpack.c.l.b16 %v531
    %v630 = vunpack.c.h.b16 %v531
    %v631 = vunpack.c.l.b16 %v532
    %v632 = vunpack.c.h.b16 %v532
    %v633 = vunpack.c.l.b16 %v533
    %v634 = vunpack.c.h.b16 %v533
    %v635 = vunpack.c.l.b16 %v534
    %v636 = vunpack.c.h.b16 %v534
    %v637 = vunpack.c.l.b16 %v535
    %v638 = vunpack.c.h.b16 %v535
    %v639 = vunpack.c.l.b16 %v536
    %v640 = vunpack.c.h.b16 %v536
    %v641 = vunpack.c.l.b16 %v537
    %v642 = vunpack.c.h.b16 %v537
    %v643 = vunpack.c.l.b16 %v538
    %v644 = vunpack.c.h.b16 %v538
    %v645 = vunpack.c.l.b16 %v539
    %v646 = vunpack.c.h.b16 %v539
    %v647 = vunpack.c.l.b16 %v540
    %v648 = vunpack.c.h.b16 %v540
    %v649 = vpack.c.b16 %v587, %v585
    %v650 = vpack.c.b16 %v588, %v586
    %v651 = vpack.c.b16 %v591, %v589
    %v652 = vpack.c.b16 %v592, %v590
    %v653 = vpack.c.b16 %v595, %v593
    %v654 = vpack.c.b16 %v596, %v594
    %v655 = vpack.c.b16 %v599, %v597
    %v656 = vpack.c.b16 %v600, %v598
    %v657 = vpack.c.b16 %v603, %v601
    %v658 = vpack.c.b16 %v604, %v602
    %v659 = vpack.c.b16 %v607, %v605
    %v660 = vpack.c.b16 %v608, %v606
    %v661 = vpack.c.b16 %v611, %v609
    %v662 = vpack.c.b16 %v612, %v610
    %v663 = vpack.c.b16 %v615, %v613
    %v664 = vpack.c.b16 %v616, %v614
    %v665 = vpack.c.b16 %v619, %v617
    %v666 = vpack.c.b16 %v620, %v618
    %v667 = vpack.c.b16 %v623, %v621
    %v668 = vpack.c.b16 %v624, %v622
    %v669 = vpack.c.b16 %v627, %v625
    %v670 = vpack.c.b16 %v628, %v626
    %v671 = vpack.c.b16 %v631, %v629
    %v672 = vpack.c.b16 %v632, %v630
    %v673 = vpack.c.b16 %v635, %v633
    %v674 = vpack.c.b16 %v636, %v634
    %v675 = vpack.c.b16 %v639, %v637
    %v676 = vpack.c.b16 %v640, %v638
    %v677 = vpack.c.b16 %v643, %v641
    %v678 = vpack.c.b16 %v644, %v642
    %v679 = vpack.c.b16 %v647, %v645
    %v680 = vpack.c.b16 %v648, %v646
    %713 = vmatprep.subr.bf16.mxu0 %v650
    %714 = vmatpush1.bf16.msra.mxu0 %v649
    %715 = vmatprep.subr.bf16.mxu0 %v652
    %716 = vmatpush1.bf16.msra.mxu0 %v651
    %717 = vmatprep.subr.bf16.mxu0 %v654
    %718 = vmatpush1.bf16.msra.mxu0 %v653
    %719 = vmatprep.subr.bf16.mxu0 %v656
    %720 = vmatpush1.bf16.msra.mxu0 %v655
    %721 = vmatprep.subr.bf16.mxu0 %v658
    %722 = vmatpush1.bf16.msra.mxu0 %v657
    %723 = vmatprep.subr.bf16.mxu0 %v660
    %724 = vmatpush1.bf16.msra.mxu0 %v659
    %725 = vmatprep.subr.bf16.mxu0 %v662
    %726 = vmatpush1.bf16.msra.mxu0 %v661
    %727 = vmatprep.subr.bf16.mxu0 %v664
    %728 = vmatpush1.bf16.msra.mxu0 %v663
    %729 = vmatprep.subr.bf16.mxu0 %v666
    %730 = vmatpush1.bf16.msra.mxu0 %v665
    %731 = vmatprep.subr.bf16.mxu0 %v668
    %732 = vmatpush1.bf16.msra.mxu0 %v667
    %733 = vmatprep.subr.bf16.mxu0 %v670
    %734 = vmatpush1.bf16.msra.mxu0 %v669
    %735 = vmatprep.subr.bf16.mxu0 %v672
    %736 = vmatpush1.bf16.msra.mxu0 %v671
    %737 = vmatprep.subr.bf16.mxu0 %v674
    %738 = vmatpush1.bf16.msra.mxu0 %v673
    %739 = vmatprep.subr.bf16.mxu0 %v676
    %740 = vmatpush1.bf16.msra.mxu0 %v675
    %741 = vmatprep.subr.bf16.mxu0 %v678
    %742 = vmatpush1.bf16.msra.mxu0 %v677
    %743 = vmatprep.subr.bf16.mxu0 %v680
    %744 = vmatpush1.bf16.msra.mxu0 %v679
    %745 = vmatprep.mubr.bf16.mxu0 %v508
    %746 = vmatmul.mubr.bf16.gmra.mrb[0].mxu0 %v507
    %v747 = vpop.f32.mrb[0].mxu0
    %v748 = vadd.f32 %v546, %v747
    %v749 = vpop.f32.mrb[0].mxu0
    %v750 = vadd.f32 %v550, %v749
    %v751 = vpop.f32.mrb[0].mxu0
    %v752 = vadd.f32 %v546, %v751
    %v753 = vpop.f32.mrb[0].mxu0
    %v754 = vadd.f32 %v550, %v753
    %755 = vdwg.mxu0
    %v756 = vmax.f32 %v748, 0.0
    %v757 = vmax.f32 %v750, 0.0
    %v758 = vmax.f32 %v752, 0.0
    %v759 = vmax.f32 %v754, 0.0
    %v760 = vpack.c.bf16 %v758, %v756
    %v761 = vpack.c.bf16 %v759, %v757
    %v762 = vld [vmem:[#allocation6] sm:$0xf]
    %v763 = vld [vmem:[#allocation6 + $0x4] sm:$0xf]
    %v764 = vld [vmem:[#allocation6 + $0x8] sm:$0xf]
    %v765 = vld [vmem:[#allocation6 + $0xc] sm:$0xf]
    %v766 = vld [vmem:[#allocation6 + $0x10] sm:$0xf]
    %v767 = vld [vmem:[#allocation6 + $0x14] sm:$0xf]
    %v768 = vld [vmem:[#allocation6 + $0x18] sm:$0xf]
    %v769 = vld [vmem:[#allocation6 + $0x1c] sm:$0xf]
    %v770 = vld [vmem:[#allocation6 + $0x20] sm:$0xf]
    %v771 = vld [vmem:[#allocation6 + $0x24] sm:$0xf]
    %v772 = vld [vmem:[#allocation6 + $0x28] sm:$0xf]
    %v773 = vld [vmem:[#allocation6 + $0x2c] sm:$0xf]
    %v774 = vld [vmem:[#allocation6 + $0x30] sm:$0xf]
    %v775 = vld [vmem:[#allocation6 + $0x34] sm:$0xf]
    %v776 = vld [vmem:[#allocation6 + $0x38] sm:$0xf]
    %v777 = vld [vmem:[#allocation6 + $0x3c] sm:$0xf]
    %v778 = vld [vmem:[#allocation6 + $0x40] sm:$0xf]
    %v779 = vld [vmem:[#allocation6 + $0x44] sm:$0xf]
    %v780 = vld [vmem:[#allocation6 + $0x48] sm:$0xf]
    %v781 = vld [vmem:[#allocation6 + $0x4c] sm:$0xf]
    %v782 = vld [vmem:[#allocation6 + $0x50] sm:$0xf]
    %v783 = vld [vmem:[#allocation6 + $0x54] sm:$0xf]
    %v784 = vld [vmem:[#allocation6 + $0x58] sm:$0xf]
    %v785 = vld [vmem:[#allocation6 + $0x5c] sm:$0xf]
    %v786 = vld [vmem:[#allocation6 + $0x60] sm:$0xf]
    %v787 = vld [vmem:[#allocation6 + $0x64] sm:$0xf]
    %v788 = vld [vmem:[#allocation6 + $0x68] sm:$0xf]
    %v789 = vld [vmem:[#allocation6 + $0x6c] sm:$0xf]
    %v790 = vld [vmem:[#allocation6 + $0x70] sm:$0xf]
    %v791 = vld [vmem:[#allocation6 + $0x74] sm:$0xf]
    %v792 = vld [vmem:[#allocation6 + $0x78] sm:$0xf]
    %v793 = vld [vmem:[#allocation6 + $0x7c] sm:$0xf]
    %v794 = vld [vmem:[%s10] sm:$0x1]
    %v796 = vlaneseq
    %v797 = vshrl.u32 %v796, 7
    %v798 = vsub.s32 0, %v797
    %v799 = vrot.slane %v794, %v798
    %v833 = vunpack.c.l.b16 %v762
    %v834 = vunpack.c.l.b16 %v763
    %v835 = vunpack.c.l.b16 %v764
    %v836 = vunpack.c.l.b16 %v765
    %v837 = vunpack.c.l.b16 %v766
    %v838 = vunpack.c.l.b16 %v767
    %v839 = vunpack.c.l.b16 %v768
    %v840 = vunpack.c.l.b16 %v769
    %v841 = vunpack.c.l.b16 %v770
    %v842 = vunpack.c.l.b16 %v771
    %v843 = vunpack.c.l.b16 %v772
    %v844 = vunpack.c.l.b16 %v773
    %v845 = vunpack.c.l.b16 %v774
    %v846 = vunpack.c.l.b16 %v775
    %v847 = vunpack.c.l.b16 %v776
    %v848 = vunpack.c.l.b16 %v777
    %v849 = vunpack.c.l.b16 %v778
    %v850 = vunpack.c.l.b16 %v779
    %v851 = vunpack.c.l.b16 %v780
    %v852 = vunpack.c.l.b16 %v781
    %v853 = vunpack.c.l.b16 %v782
    %v854 = vunpack.c.l.b16 %v783
    %v855 = vunpack.c.l.b16 %v784
    %v856 = vunpack.c.l.b16 %v785
    %v857 = vunpack.c.l.b16 %v786
    %v858 = vunpack.c.l.b16 %v787
    %v859 = vunpack.c.l.b16 %v788
    %v860 = vunpack.c.l.b16 %v789
    %v861 = vunpack.c.l.b16 %v790
    %v862 = vunpack.c.l.b16 %v791
    %v863 = vunpack.c.l.b16 %v792
    %v864 = vunpack.c.l.b16 %v793
    %v865 = vpack.c.b16 %v834, %v833
    %v866 = vpack.c.b16 %v836, %v835
    %v867 = vpack.c.b16 %v838, %v837
    %v868 = vpack.c.b16 %v840, %v839
    %v869 = vpack.c.b16 %v842, %v841
    %v870 = vpack.c.b16 %v844, %v843
    %v871 = vpack.c.b16 %v846, %v845
    %v872 = vpack.c.b16 %v848, %v847
    %v873 = vpack.c.b16 %v850, %v849
    %v874 = vpack.c.b16 %v852, %v851
    %v875 = vpack.c.b16 %v854, %v853
    %v876 = vpack.c.b16 %v856, %v855
    %v877 = vpack.c.b16 %v858, %v857
    %v878 = vpack.c.b16 %v860, %v859
    %v879 = vpack.c.b16 %v862, %v861
    %v880 = vpack.c.b16 %v864, %v863
    %897 = vmatprep.subr.bf16.mxu0 0
    %898 = vmatpush1.bf16.msra.mxu0 %v865
    %899 = vmatprep.subr.bf16.mxu0 0
    %900 = vmatpush1.bf16.msra.mxu0 %v866
    %901 = vmatprep.subr.bf16.mxu0 0
    %902 = vmatpush1.bf16.msra.mxu0 %v867
    %903 = vmatprep.subr.bf16.mxu0 0
    %904 = vmatpush1.bf16.msra.mxu0 %v868
    %905 = vmatprep.subr.bf16.mxu0 0
    %906 = vmatpush1.bf16.msra.mxu0 %v869
    %907 = vmatprep.subr.bf16.mxu0 0
    %908 = vmatpush1.bf16.msra.mxu0 %v870
    %909 = vmatprep.subr.bf16.mxu0 0
    %910 = vmatpush1.bf16.msra.mxu0 %v871
    %911 = vmatprep.subr.bf16.mxu0 0
    %912 = vmatpush1.bf16.msra.mxu0 %v872
    %913 = vmatprep.subr.bf16.mxu0 0
    %914 = vmatpush1.bf16.msra.mxu0 %v873
    %915 = vmatprep.subr.bf16.mxu0 0
    %916 = vmatpush1.bf16.msra.mxu0 %v874
    %917 = vmatprep.subr.bf16.mxu0 0
    %918 = vmatpush1.bf16.msra.mxu0 %v875
    %919 = vmatprep.subr.bf16.mxu0 0
    %920 = vmatpush1.bf16.msra.mxu0 %v876
    %921 = vmatprep.subr.bf16.mxu0 0
    %922 = vmatpush1.bf16.msra.mxu0 %v877
    %923 = vmatprep.subr.bf16.mxu0 0
    %924 = vmatpush1.bf16.msra.mxu0 %v878
    %925 = vmatprep.subr.bf16.mxu0 0
    %926 = vmatpush1.bf16.msra.mxu0 %v879
    %927 = vmatprep.subr.bf16.mxu0 0
    %928 = vmatpush1.bf16.msra.mxu0 %v880
    %929 = vmatprep.mubr.bf16.mxu0 %v761
    %930 = vmatmul.mubr.bf16.gmra.mrb[0].mxu0 %v760
    %v931 = vpop.f32.mrb[0].mxu0
    %v932 = vadd.f32 %v799, %v931
    %v933 = vpop.f32.mrb[0].mxu0
    %v934 = vpop.f32.mrb[0].mxu0
    %v935 = vadd.f32 %v799, %v934
    %v936 = vpop.f32.mrb[0].mxu0
    %937 = vdwg.mxu0
    %938 = vmax.xlane.f32.xlu0 %v932
    %v939 = vpop.xlane.xlu0 %938
    %940 = vmax.xlane.f32.xlu0 %v935
    %v941 = vpop.xlane.xlu0 %940
    %v942 = vsub.f32 %v932, %v939
    %v943 = vsub.f32 %v935, %v941
    %v944 = vmul.f32 %v942, 1.442695
    %v945 = vpow.pop %v944
    %v946 = vmul.f32 %v943, 1.442695
    %v947 = vpow.pop %v946
    %948 = vadd.xlane.f32.xlu0 %v945
    %v949 = vpop.xlane.xlu0 %948
    %950 = vadd.xlane.f32.xlu0 %v947
    %v951 = vpop.xlane.xlu0 %950
    %v952 = vrcp.pop %v949
    %v953 = vmul.f32 %v945, %v952
    %v954 = vrcp.pop %v951
    %v955 = vmul.f32 %v947, %v954
    %v956 = vpack.c.bf16 %v955, %v953
    %v958 = vunpack.c.l.b16 %v956
    %v959 = vunpack.c.h.b16 %v956
    %v960 = vpack.c.b16 %v958, %v958
    %v961 = vpack.c.b16 %v959, %v959
    %964 = vst [vmem:[%s11] sm:$0xf] %v960
    %965 = vst [vmem:[%s11 + $0x4] sm:$0xf] %v961
    // Predicated region
    $region58: #{critic_forward.1} parent=1 // pred_check
      _
    $region59: #{critic_forward.1} parent=1 // pred_check_branch
      %967 = sbr.rel (0) target = $region61
    $region60: #{critic_forward.1} parent=1 // pred_region
      _
    $region61: #{critic_forward.1} parent=1 // pred_fallthru
      _
    // Predicated region
    $region62: #{critic_forward.1} parent=1 // pred_check
      _
    $region63: #{critic_forward.1} parent=1 // pred_check_branch
      %969 = sbr.rel (0) target = $region65
    $region64: #{critic_forward.1} parent=1 // pred_region
      _
    $region65: #{critic_forward.1} parent=1 // pred_fallthru
      _
    %970 = vsyncpa [#allocation3], 1
    %971 = vsyncpa [#allocation5], 1

</llo_original>
